<compile_context>
chip_gen: v7x
topology: tpu7x:2x2x1
jax: 0.10.0
libtpu: 0.0.40
codegen_flags: <defaults>
</compile_context>

<pallas_src>
import math

import jax
import jax.numpy as jnp
from jax.experimental import pallas as pl
from jax.experimental.pallas import tpu as pltpu


_TARGET_BLOCK_BYTES = 4 << 20   # ~4 MiB per buffered array
_VMEM_LIMIT = 40 << 20          # 3 arrays x 2 buffers x 4 MiB = 24 MiB + headroom


def _div_kernel(num_ref, den_ref, out_ref):
    # In-kernel cast (free on the VPU); compute in f32, store in out dtype.
    # jnp broadcasting handles size-1 block dims of either operand.
    num = num_ref[...].astype(jnp.float32)
    den = den_ref[...].astype(jnp.float32)
    out_ref[...] = (num / den).astype(out_ref.dtype)


def _flat_cols(total):
    for c in (1024, 512, 256, 128):
        if total % c == 0:
            return c
    return None


def pallas_div(numerator: jax.Array, denominator: jax.Array) -> jax.Array:
    """torch.div(numerator, denominator) — true (floating) division."""
    out_shape = jnp.broadcast_shapes(numerator.shape, denominator.shape)
    res_dtype = jnp.result_type(numerator.dtype, denominator.dtype)
    out_dtype = res_dtype if jnp.issubdtype(res_dtype, jnp.floating) else jnp.float32
    total = int(math.prod(out_shape)) if out_shape else 1

    if total == 0:
        return jnp.zeros(out_shape, out_dtype)

    num_full = numerator.shape == out_shape
    den_full = denominator.shape == out_shape
    num_scalar = math.prod(numerator.shape) == 1
    den_scalar = math.prod(denominator.shape) == 1

    # Advisory cost model: true bytes moved (no padded/broadcast copies).
    cost = pl.CostEstimate(
        flops=total,
        transcendentals=total,  # f32 divide lowers through an EUP reciprocal
        bytes_accessed=(math.prod(numerator.shape) * jnp.dtype(numerator.dtype).itemsize
                        + math.prod(denominator.shape) * jnp.dtype(denominator.dtype).itemsize
                        + total * jnp.dtype(out_dtype).itemsize),
    )
    cparams = pltpu.CompilerParams(
        dimension_semantics=("parallel",),   # lets v7x shard the axis over 2 TCs
        vmem_limit_bytes=_VMEM_LIMIT,
    )

    # ---------- Path A: lane-dense flat layout (no pad, no copies) ----------
    # Both operands are either full-size or size-1, and total divides 128.
    if total % 128 == 0 and (num_full or num_scalar) and (den_full or den_scalar):
        cols = _flat_cols(total)
        rows = total // cols

        itemsizes = [jnp.dtype(out_dtype).itemsize]
        if num_full:
            itemsizes.append(jnp.dtype(numerator.dtype).itemsize)
        if den_full:
            itemsizes.append(jnp.dtype(denominator.dtype).itemsize)
        max_item = max(itemsizes)

        # ~4 MiB per buffered array, scaled by itemsize; power-of-two => 8-aligned.
        block_rows = max(8, _TARGET_BLOCK_BYTES // (cols * max_item))
        block_rows = min(block_rows, rows)
        grid = (pl.cdiv(rows, block_rows),)

        def arr_and_spec(a, full):
            if full:
                return a.reshape(rows, cols), pl.BlockSpec((block_rows, cols), lambda i: (i, 0))
            # size-1 operand: single (1,1) VMEM block, broadcast in-kernel.
            return a.reshape(1, 1), pl.BlockSpec((1, 1), lambda i: (0, 0))

        num2, num_spec = arr_and_spec(numerator, num_full)
        den2, den_spec = arr_and_spec(denominator, den_full)

        out2 = pl.pallas_call(
            _div_kernel,
            out_shape=jax.ShapeDtypeStruct((rows, cols), out_dtype),
            grid_spec=pltpu.PrefetchScalarGridSpec(
                num_scalar_prefetch=0,
                grid=grid,
                in_specs=[num_spec, den_spec],
                out_specs=pl.BlockSpec((block_rows, cols), lambda i: (i, 0)),
            ),
            compiler_params=cparams,
            cost_estimate=cost,
        )(num2, den2)
        return out2.reshape(out_shape)

    # ---------- Path B: general N-D path (broadcast via index_map) ----------
    # Keep the natural shape, tile only the leading output dim, keep all
    # trailing dims at full extent (Pallas masks partial blocks).  Broadcast
    # dims stay size-1 in the operand's block and broadcast in-kernel.
    nd = max(len(out_shape), 2)
    out_nd = (1,) * (nd - len(out_shape)) + tuple(out_shape)

    def align(a):
        return a.reshape((1,) * (nd - a.ndim) + a.shape)

    num_a = align(numerator)
    den_a = align(denominator)

    d0 = out_nd[0]
    trailing = out_nd[1:]

    def row_bytes(a):
        return (math.prod(a.shape[1:]) * jnp.dtype(a.dtype).itemsize
                if a.shape[0] == d0 else 0)

    out_row_bytes = math.prod(trailing) * jnp.dtype(out_dtype).itemsize
    max_row = max(out_row_bytes, row_bytes(num_a), row_bytes(den_a), 1)
    b0 = max(1, min(d0, _TARGET_BLOCK_BYTES // max_row))
    if nd == 2 and b0 < d0:
        # dim0 is the sublane dim in the 2-D case: multiple of 8 or full extent.
        b0 = min(d0, max(8, (b0 // 8) * 8))
    # TODO(synk): if a single trailing row exceeds the VMEM budget (huge prime
    # last dims), split trailing dims across a second grid axis instead.

    grid = (pl.cdiv(d0, b0),)

    def nd_spec(a):
        on_grid = a.shape[0] == d0
        bshape = ((b0 if on_grid else 1),) + tuple(a.shape[1:])
        if on_grid:
            idx = lambda i: (i,) + (0,) * (nd - 1)
        else:
            idx = lambda i: (0,) * nd
        return pl.BlockSpec(bshape, idx)

    out2 = pl.pallas_call(
        _div_kernel,
        out_shape=jax.ShapeDtypeStruct(out_nd, out_dtype),
        grid_spec=pltpu.PrefetchScalarGridSpec(
            num_scalar_prefetch=0,
            grid=grid,
            in_specs=[nd_spec(num_a), nd_spec(den_a)],
            out_specs=pl.BlockSpec((b0,) + trailing, lambda i: (i,) + (0,) * (nd - 1)),
        ),
        compiler_params=cparams,
        cost_estimate=cost,
    )(num_a, den_a)
    return out2.reshape(out_shape)


if __name__ == "__main__":
    key = jax.random.PRNGKey(0)
    k1, k2, k3, k4, k5 = jax.random.split(key, 5)

    # 1) Primary test — equal-shape f32 (lane-dense flat path, zero copies).
    x = jax.random.normal(k1, (2, 4, 16, 16), dtype=jnp.float32)
    y = jax.random.uniform(k2, (2, 4, 16, 16), dtype=jnp.float32,
                           minval=0.5, maxval=2.0)
    out = pallas_div(x, y)
    jax.block_until_ready(out)
    ref = x / y
    assert out.shape == ref.shape and out.dtype == ref.dtype
    assert jnp.allclose(out, ref, rtol=1e-6, atol=1e-6)

    # 2) Broadcast denominator (16,) — N-D index_map broadcast (no broadcast_to).
    yb = jax.random.uniform(k3, (16,), dtype=jnp.float32, minval=0.5, maxval=2.0)
    out_b = pallas_div(x, yb)
    jax.block_until_ready(out_b)
    assert jnp.allclose(out_b, x / yb, rtol=1e-6, atol=1e-6)

    # 3) Scalar denominator — (1,1) VMEM block broadcast in-kernel.
    ys = jnp.asarray(1.7, dtype=jnp.float32)
    out_s = pallas_div(x, ys)
    jax.block_until_ready(out_s)
    assert jnp.allclose(out_s, x / ys, rtol=1e-6, atol=1e-6)

    # 4) Integer inputs — torch.div true division => float32 output.
    xi = jax.random.randint(k4, (2, 4, 16, 16), minval=-20, maxval=20, dtype=jnp.int32)
    yi = jax.random.randint(k5, (2, 4, 16, 16), minval=1, maxval=9, dtype=jnp.int32)
    out_i = pallas_div(xi, yi)
    jax.block_until_ready(out_i)
    ref_i = xi.astype(jnp.float32) / yi.astype(jnp.float32)
    assert out_i.dtype == jnp.float32
    assert jnp.allclose(out_i, ref_i, rtol=1e-6, atol=1e-6)

    # 5) Non-128-divisible equal shapes — full-extent N-D path (no jnp.pad).
    xo = jax.random.normal(k1, (3, 5, 7), dtype=jnp.float32)
    yo = jax.random.uniform(k2, (3, 5, 7), dtype=jnp.float32, minval=0.5, maxval=2.0)
    out_o = pallas_div(xo, yo)
    jax.block_until_ready(out_o)
    assert jnp.allclose(out_o, xo / yo, rtol=1e-6, atol=1e-6)

    print("KERNEL_OK")
</pallas_src>

<mosaic_0001>
module attributes {stable_mosaic.version = 11 : i64} {
  func.func @_div_kernel(%arg0: i32, %arg1: memref<2x1024xf32, #tpu.memory_space<vmem>>, %arg2: memref<2x1024xf32, #tpu.memory_space<vmem>>, %arg3: memref<2x1024xf32, #tpu.memory_space<vmem>>) attributes {dimension_semantics = [#tpu.dimension_semantics<parallel>], iteration_bounds = array<i64: 1>, scalar_prefetch = 0 : i64, scratch_operands = 0 : i64, tpu.core_type = #tpu.core_type<tc>, window_params = [{transform_indices = @transform_0, window_bounds = array<i64: 2, 1024>}, {transform_indices = @transform_1, window_bounds = array<i64: 2, 1024>}, {transform_indices = @transform_2, window_bounds = array<i64: 2, 1024>}]} {
    %c0 = arith.constant 0 : index
    %c0_0 = arith.constant 0 : index
    %0 = vector.load %arg1[%c0, %c0_0] : memref<2x1024xf32, #tpu.memory_space<vmem>>, vector<2x1024xf32>
    %c0_1 = arith.constant 0 : index
    %c0_2 = arith.constant 0 : index
    %1 = vector.load %arg2[%c0_1, %c0_2] : memref<2x1024xf32, #tpu.memory_space<vmem>>, vector<2x1024xf32>
    %2 = arith.divf %0, %1 : vector<2x1024xf32>
    %c0_3 = arith.constant 0 : index
    %c0_4 = arith.constant 0 : index
    %3 = vector.load %arg3[%c0_3, %c0_4] : memref<2x1024xf32, #tpu.memory_space<vmem>>, vector<2x1024xf32>
    tpu.vector_store %arg3[%c0_3, %c0_4], %2 {strides = array<i32>} : memref<2x1024xf32, #tpu.memory_space<vmem>>, vector<2x1024xf32>,
    return
  }
  func.func @transform_0(%arg0: i32) -> (i32, i32) {
    %c0_i32 = arith.constant 0 : i32
    %c0_i32_0 = arith.constant 0 : i32
    return %arg0, %c0_i32 : i32, i32
  }
  func.func @transform_1(%arg0: i32) -> (i32, i32) {
    %c0_i32 = arith.constant 0 : i32
    %c0_i32_0 = arith.constant 0 : i32
    return %arg0, %c0_i32 : i32, i32
  }
  func.func @transform_2(%arg0: i32) -> (i32, i32) {
    %c0_i32 = arith.constant 0 : i32
    %c0_i32_0 = arith.constant 0 : i32
    return %arg0, %c0_i32 : i32, i32
  }
}

</mosaic_0001>

<llo_original>
// kernel: tpu_custom_call.1
$region0: #{tpu_custom_call.1}
  #allocation0 [shape = 'u32[]', space=smem, size = 0x4, offset = 0x4, fixed_abs, tag = 'smem constant byte address 0x4 - core index']
  #allocation1 [shape = 'u32[144,128]{1,0:T(1,128)}', space=vmem, size = 0x12000, scoped, tag = 'internal scratch']
  %s0 = inlined_call_operand.hbm [shape: f32[2,1024], index: 0, kind: input, shape index: {}]
  %s1 = inlined_call_operand.hbm [shape: f32[2,1024], index: 1, kind: input, shape index: {}]
  %s2 = inlined_call_operand.hbm [shape: f32[2,1024], index: 2, kind: output, shape index: {}]
  %s3 = sld [smem:[#allocation0]]
  $region26: #{tpu_custom_call.1} parent=0
    _
  %s5 = ssub.s32 1, %s3
  %s6 = scalar_select 0, %s5, %s3
  $region1: #{tpu_custom_call.1} parent=0
    #allocation2 [shape = 'u8[8192]{0}', space=vmem, size = 0x2000, scoped, tag = 'input window, operand 0, single buffered']
    #allocation3 [shape = 's32[1]{0}', space=sflag, size = 0x4, scoped, tag = 'scoped memory for tpu_custom_call.1']
    #allocation4 [shape = 's32[1]{0}', space=sflag, size = 0x4, scoped, tag = 'scoped memory for tpu_custom_call.1']
    #allocation5 [shape = 'u8[8192]{0}', space=vmem, size = 0x2000, scoped, tag = 'input window, operand 1, single buffered']
    #allocation6 [shape = 's32[1]{0}', space=sflag, size = 0x4, scoped, tag = 'scoped memory for tpu_custom_call.1']
    #allocation7 [shape = 'u8[8192]{0}', space=vmem, size = 0x2000, scoped, tag = 'output window, operand 0, single buffered']
    %7 = vsyncpa [#allocation3], 0
    %8 = vsyncpa [#allocation6], 0
    %9 = vsyncpa [#allocation4], 0
    // Predicated region
    $region2: #{tpu_custom_call.1} parent=1 // pred_check
      _
    $region3: #{tpu_custom_call.1} parent=1 // pred_check_branch
      %11 = sbr.rel (0) target = $region5
    $region4: #{tpu_custom_call.1} parent=1 // pred_region
      %s13 = ssub.s32 256, 256
      %14 = vsyncadd [#allocation3], %s13
      %s16 = sshll.u32 [#allocation2], 4
      %s17 = int_to_ptr.vmem [resolvable:$true] %s16
      %19 = dma.hbm_to_vmem [thread:$0]  %s0, 256, %s17, [#allocation3]
    $region5: #{tpu_custom_call.1} parent=1 // pred_fallthru
      _
    // Predicated region
    $region6: #{tpu_custom_call.1} parent=1 // pred_check
      _
    $region7: #{tpu_custom_call.1} parent=1 // pred_check_branch
      %21 = sbr.rel (0) target = $region9
    $region8: #{tpu_custom_call.1} parent=1 // pred_region
      %s23 = ssub.s32 256, 256
      %24 = vsyncadd [#allocation6], %s23
      %s26 = sshll.u32 [#allocation5], 4
      %s27 = int_to_ptr.vmem [resolvable:$true] %s26
      %29 = dma.hbm_to_vmem [thread:$0]  %s1, 256, %s27, [#allocation6]
    $region9: #{tpu_custom_call.1} parent=1 // pred_fallthru
      _
    // Predicated region
    $region10: #{tpu_custom_call.1} parent=1 // pred_check
      _
    $region11: #{tpu_custom_call.1} parent=1 // pred_check_branch
      %31 = sbr.rel (0) target = $region13
    $region12: #{tpu_custom_call.1} parent=1 // pred_region
      %32 = dma.done [#allocation3], 256
    $region13: #{tpu_custom_call.1} parent=1 // pred_fallthru
      _
    // Predicated region
    $region14: #{tpu_custom_call.1} parent=1 // pred_check
      _
    $region15: #{tpu_custom_call.1} parent=1 // pred_check_branch
      %34 = sbr.rel (0) target = $region17
    $region16: #{tpu_custom_call.1} parent=1 // pred_region
      %35 = dma.done [#allocation6], 256
    $region17: #{tpu_custom_call.1} parent=1 // pred_fallthru
      _
    %v36 = vld [vmem:[#allocation2] sm:$0xff]
    %v37 = vld [vmem:[#allocation2 + $0x8] sm:$0xff]
    %v38 = vld [vmem:[#allocation5] sm:$0xff]
    %v39 = vld [vmem:[#allocation5 + $0x8] sm:$0xff]
    %v40 = vrcp.pop %v38
    %v41 = vmul.f32 %v36, %v40
    %v42 = vrcp.pop %v39
    %v43 = vmul.f32 %v37, %v42
    %44 = vst [vmem:[#allocation7] sm:$0xff] %v41
    %45 = vst [vmem:[#allocation7 + $0x8] sm:$0xff] %v43
    // Predicated region
    $region18: #{tpu_custom_call.1} parent=1 // pred_check
      _
    $region19: #{tpu_custom_call.1} parent=1 // pred_check_branch
      %47 = sbr.rel (0) target = $region21
    $region20: #{tpu_custom_call.1} parent=1 // pred_region
      %s49 = ssub.s32 256, 256
      %50 = vsyncadd [#allocation4], %s49
      %s52 = sshll.u32 [#allocation7], 4
      %s53 = int_to_ptr.vmem [resolvable:$true] %s52
      %55 = dma.vmem_to_hbm [thread:$0]  %s53, 256, %s2, [#allocation4]
    $region21: #{tpu_custom_call.1} parent=1 // pred_fallthru
      _
    // Predicated region
    $region22: #{tpu_custom_call.1} parent=1 // pred_check
      _
    $region23: #{tpu_custom_call.1} parent=1 // pred_check_branch
      %57 = sbr.rel (0) target = $region25
    $region24: #{tpu_custom_call.1} parent=1 // pred_region
      %58 = dma.done [#allocation4], 256
    $region25: #{tpu_custom_call.1} parent=1 // pred_fallthru
      _
    %59 = vsyncpa [#allocation3], 1
    %60 = vsyncpa [#allocation6], 1
    %61 = vsyncpa [#allocation4], 1

</llo_original>
